<compile_context>
chip_gen: v5e
topology: v5e:2x2
jax: 0.10.0
libtpu: 0.0.40
codegen_flags: <defaults>
</compile_context>

<pallas_src>
import functools
import math

import jax
import jax.numpy as jnp
from jax import lax
from jax.experimental import pallas as pl
from jax.experimental.pallas import tpu as pltpu


def _round_up(n, m):
    return ((n + m - 1) // m) * m


def _vmem_capacity_bytes(default=64 << 20):
    """Per-core VMEM capacity (v7x: 64 MiB, v5e/v6e: 128 MiB); conservative default."""
    try:
        cap = getattr(pltpu.get_tpu_info(), "vmem_capacity_bytes", None)
        if cap:
            return int(cap)
    except Exception:
        pass
    return default


def _choose_tiling(batch, max_tile, chunk, vmem_cap_bytes):
    """Pick (tile, chunk): chunk | tile, both multiples of 128, VMEM-aware."""
    chunk = max(128, (chunk // 128) * 128)
    max_tile = max(128, (max_tile // 128) * 128)

    # Per batch row the pipeline holds 2 x-buffers (10 -> 128 lane pad: 512 B)
    # and 2 out-buffers (1 -> 8 sublane pad: 32 B).  Keep them within ~half of
    # VMEM so weights, chunk temporaries and compiler scratch have headroom.
    bytes_per_row = 2 * (128 * 4 + 8 * 4)
    vmem_rows = (vmem_cap_bytes // 2) // bytes_per_row
    max_tile = min(max_tile, max(128, (vmem_rows // 128) * 128))

    tile = min(max_tile, _round_up(batch, 128))
    chunk = min(chunk, tile)
    if tile % chunk:
        tile = min(_round_up(tile, chunk), (max_tile // chunk) * chunk)

    # v7x has two TensorCores; a single grid step leaves one idle.  If the whole
    # (padded) batch fits in one tile but is large enough to split, halve it so
    # the "parallel" grid axis has >= 2 steps.  (No-op on small batches.)
    if batch <= tile and tile >= 2 * 8192:
        tile = _round_up(-(-tile // 2), chunk)
    return tile, chunk


def _mlp_kernel(x_ref, w1_ref, b1_ref, w2_ref, b2_ref, o_ref, *, chunk, n_chunks):
    # x_ref : (tile, 10) natural-layout activations for this batch tile
    # w1_ref: (50, 10)   fc1 weight (PyTorch (out, in) layout), VMEM-resident
    # b1_ref: (50, 1)    fc1 bias (broadcasts over lanes)
    # w2_ref: (1, 50)    fc2 weight
    # b2_ref: (1, 1)     fc2 bias, SMEM scalar
    # o_ref : (1, tile)  lane-dense output tile (batch on lanes)
    w1 = w1_ref[...]
    b1 = b1_ref[...]
    w2 = w2_ref[...]
    b2 = b2_ref[0, 0]

    def body(c, carry):
        off = pl.multiple_of(c * chunk, chunk)
        xc = x_ref[pl.ds(off, chunk), :]                            # (chunk, 10)
        # fc1 as an NT contraction: (50,10) . (chunk,10)^T -> (50, chunk).
        # x needs no wrapper-side transpose; batch lands on the lane axis.
        h = lax.dot_general(w1, xc, (((1,), (1,)), ((), ())),
                            preferred_element_type=jnp.float32)
        h = jnp.maximum(h + b1, 0.0)                                # ReLU
        y = jnp.dot(w2, h, preferred_element_type=jnp.float32)      # (1, chunk)
        o_ref[:, pl.ds(off, chunk)] = (y + b2).astype(o_ref.dtype)
        return carry

    # Chunked compute keeps the hidden temp at (50, chunk) ~ 0.5 MiB regardless
    # of the tile size; unrolled so the LLO scheduler sees the whole pipeline.
    lax.fori_loop(0, n_chunks, body, 0, unroll=True)


@functools.partial(jax.jit, static_argnames=("max_tile", "chunk"))
def simple_net_forward(x, w1, b1, w2, b2, *, max_tile=32768, chunk=2048):
    """Forward pass of SimpleNet: relu(x @ w1.T + b1) @ w2.T + b2.

    x : (B, 10) f32; w1: (50, 10); b1: (50,); w2: (1, 50); b2: (1,).
    Returns (B, 1) f32.
    """
    batch, in_f = x.shape
    hidden = w1.shape[0]

    vmem_cap = _vmem_capacity_bytes()
    tile, chunk = _choose_tiling(batch, max_tile, chunk, vmem_cap)
    n_chunks = tile // chunk
    b_pad = _round_up(batch, tile)
    num_tiles = b_pad // tile

    x = x.astype(jnp.float32)
    if b_pad != batch:
        # Pad only the batch axis so the last tile's DMAs stay in bounds; no
        # transpose / lane re-layout happens outside the kernel.
        x = jnp.pad(x, ((0, b_pad - batch), (0, 0)))

    b1_2d = b1.reshape(hidden, 1).astype(jnp.float32)
    b2_2d = b2.reshape(1, 1).astype(jnp.float32)

    # Raise the scoped VMEM limit explicitly (v5e defaults to 16 MiB scoped,
    # v6e/v7x to 32 MiB), sized from the actual double-buffered block footprint.
    block_bytes = 2 * (tile * 128 * 4 + tile * 8 * 4)
    vmem_limit = int(max(32 << 20, min(vmem_cap * 3 // 4, block_bytes + (16 << 20))))

    kernel = functools.partial(_mlp_kernel, chunk=chunk, n_chunks=n_chunks)

    out = pl.pallas_call(
        kernel,
        out_shape=jax.ShapeDtypeStruct((1, b_pad), jnp.float32),
        grid=(num_tiles,),
        in_specs=[
            # x: streamed per batch tile (double-buffered by the pipeline).
            pl.BlockSpec((tile, in_f), lambda i: (i, 0)),
            # weights / fc1 bias: constant block index -> resident in VMEM.
            pl.BlockSpec(w1.shape, lambda i: (0, 0)),
            pl.BlockSpec((hidden, 1), lambda i: (0, 0)),
            pl.BlockSpec(w2.shape, lambda i: (0, 0)),
            # fc2 bias as an SMEM scalar.
            pl.BlockSpec(memory_space=pltpu.MemorySpace.SMEM),
        ],
        out_specs=pl.BlockSpec((1, tile), lambda i: (0, i)),
        compiler_params=pltpu.CompilerParams(
            dimension_semantics=("parallel",),
            vmem_limit_bytes=vmem_limit,
        ),
    )(x, w1.astype(jnp.float32), b1_2d, w2.astype(jnp.float32), b2_2d)

    # Drop batch padding; return (B, 1) to match the PyTorch module's output.
    return out[0, :batch].reshape(batch, 1)


def init_params(key, init_method="xavier"):
    """Deterministic parameter init mirroring the PyTorch __init__ options.

    Weights are in PyTorch (out_features, in_features) layout — exactly what
    the kernel consumes.
    """
    k1, k2, k3, k4 = jax.random.split(key, 4)

    def make_weight(k, out_f, in_f):
        if init_method == "zero":
            return jnp.zeros((out_f, in_f), jnp.float32)
        elif init_method == "xavier":
            a = math.sqrt(6.0 / (in_f + out_f))           # xavier_uniform_
            return jax.random.uniform(k, (out_f, in_f), jnp.float32, -a, a)
        elif init_method == "he":
            b = math.sqrt(6.0 / in_f)                     # kaiming_uniform_ (relu)
            return jax.random.uniform(k, (out_f, in_f), jnp.float32, -b, b)
        else:
            b = math.sqrt(6.0 / ((1.0 + 5.0) * in_f))     # PyTorch Linear default
            return jax.random.uniform(k, (out_f, in_f), jnp.float32, -b, b)

    def make_bias(k, out_f, in_f):
        bound = 1.0 / math.sqrt(in_f)                     # PyTorch Linear default
        return jax.random.uniform(k, (out_f,), jnp.float32, -bound, bound)

    w1 = make_weight(k1, 50, 10)
    b1 = make_bias(k2, 50, 10)
    w2 = make_weight(k3, 1, 50)
    b2 = make_bias(k4, 1, 50)
    return w1, b1, w2, b2


if __name__ == "__main__":
    key = jax.random.PRNGKey(0)
    kx, kp = jax.random.split(key)

    B = 8
    x = jax.random.normal(kx, (B, 10), jnp.float32)
    w1, b1, w2, b2 = init_params(kp, init_method="xavier")

    out = simple_net_forward(x, w1, b1, w2, b2)
    out = jax.block_until_ready(out)

    # Reference check in plain JAX (same math as the PyTorch forward).
    hi = jax.lax.Precision.HIGHEST
    ref = jnp.maximum(jnp.dot(x, w1.T, precision=hi) + b1[None, :], 0.0)
    ref = jnp.dot(ref, w2.T, precision=hi) + b2[None, :]
    assert out.shape == (B, 1)
    assert jnp.allclose(out, ref, atol=1e-4, rtol=1e-4)

    print("KERNEL_OK")
</pallas_src>

<mosaic_0001>
module attributes {stable_mosaic.version = 11 : i64} {
  func.func @_mlp_kernel(%arg0: i32, %arg1: memref<128x10xf32, #tpu.memory_space<vmem>>, %arg2: memref<50x10xf32, #tpu.memory_space<vmem>>, %arg3: memref<50x1xf32, #tpu.memory_space<vmem>>, %arg4: memref<1x50xf32, #tpu.memory_space<vmem>>, %arg5: memref<1x1xf32, #tpu.memory_space<smem>>, %arg6: memref<1x128xf32, #tpu.memory_space<vmem>>) attributes {dimension_semantics = [#tpu.dimension_semantics<parallel>], iteration_bounds = array<i64: 1>, scalar_prefetch = 0 : i64, scratch_operands = 0 : i64, tpu.core_type = #tpu.core_type<tc>, window_params = [{transform_indices = @transform_0, window_bounds = array<i64: 128, 10>}, {pipeline_mode = #tpu.pipeline_mode<synchronous>, transform_indices = @transform_1, window_bounds = array<i64: 50, 10>}, {pipeline_mode = #tpu.pipeline_mode<synchronous>, transform_indices = @transform_2, window_bounds = array<i64: 50, 1>}, {pipeline_mode = #tpu.pipeline_mode<synchronous>, transform_indices = @transform_3, window_bounds = array<i64: 1, 50>}, {transform_indices = @transform_4, window_bounds = array<i64: 1, 1>}, {transform_indices = @transform_5, window_bounds = array<i64: 1, 128>}]} {
    %c0 = arith.constant 0 : index
    %c0_0 = arith.constant 0 : index
    %0 = vector.load %arg2[%c0, %c0_0] : memref<50x10xf32, #tpu.memory_space<vmem>>, vector<50x10xf32>
    %c0_1 = arith.constant 0 : index
    %c0_2 = arith.constant 0 : index
    %1 = vector.load %arg3[%c0_1, %c0_2] : memref<50x1xf32, #tpu.memory_space<vmem>>, vector<50x1xf32>
    %c0_3 = arith.constant 0 : index
    %c0_4 = arith.constant 0 : index
    %2 = vector.load %arg4[%c0_3, %c0_4] : memref<1x50xf32, #tpu.memory_space<vmem>>, vector<1x50xf32>
    %c0_5 = arith.constant 0 : index
    %c0_6 = arith.constant 0 : index
    %3 = memref.load %arg5[%c0_5, %c0_6] : memref<1x1xf32, #tpu.memory_space<smem>>
    %c0_i32 = arith.constant 0 : i32
    %c128_i32 = arith.constant 128 : i32
    %4 = arith.muli %c0_i32, %c128_i32 : i32
    %5 = tpu.assume_multiple %4, 128 : i32
    %6 = arith.index_cast %5 : i32 to index
    %c0_7 = arith.constant 0 : index
    %7 = vector.load %arg1[%6, %c0_7] : memref<128x10xf32, #tpu.memory_space<vmem>>, vector<128x10xf32>
    %cst = arith.constant dense<0.000000e+00> : vector<50x128xf32>
    %8 = tpu.matmul %0, %7, %cst {dimension_numbers = #tpu.dot_dimension_numbers<[1], [1], [0], [0], [0, 0, 1, 0], [], []>} : vector<50x10xf32>, vector<128x10xf32>, vector<50x128xf32> -> vector<50x128xf32>
    %9 = vector.broadcast %1 : vector<50x1xf32> to vector<50x128xf32>
    %10 = arith.addf %8, %9 : vector<50x128xf32>
    %cst_8 = arith.constant 0.000000e+00 : f32
    %11 = vector.broadcast %cst_8 : f32 to vector<50x128xf32>
    %12 = arith.maximumf %10, %11 : vector<50x128xf32>
    %cst_9 = arith.constant dense<0.000000e+00> : vector<1x128xf32>
    %13 = tpu.matmul %2, %12, %cst_9 {dimension_numbers = #tpu.dot_dimension_numbers<[1], [0], [0], [1], [0, 0, 1, 1], [], []>} : vector<1x50xf32>, vector<50x128xf32>, vector<1x128xf32> -> vector<1x128xf32>
    %14 = vector.broadcast %3 : f32 to vector<1x128xf32>
    %15 = arith.addf %13, %14 : vector<1x128xf32>
    %c0_10 = arith.constant 0 : index
    %16 = arith.index_cast %5 : i32 to index
    %17 = vector.load %arg6[%c0_10, %16] : memref<1x128xf32, #tpu.memory_space<vmem>>, vector<1x128xf32>
    tpu.vector_store %arg6[%c0_10, %16], %15 {strides = array<i32>} : memref<1x128xf32, #tpu.memory_space<vmem>>, vector<1x128xf32>,
    %c1_i32 = arith.constant 1 : i32
    return
  }
  func.func @transform_0(%arg0: i32) -> (i32, i32) {
    %c0_i32 = arith.constant 0 : i32
    %c0_i32_0 = arith.constant 0 : i32
    return %arg0, %c0_i32 : i32, i32
  }
  func.func @transform_1(%arg0: i32) -> (i32, i32) {
    %c0_i32 = arith.constant 0 : i32
    %c0_i32_0 = arith.constant 0 : i32
    %c0_i32_1 = arith.constant 0 : i32
    return %c0_i32, %c0_i32_0 : i32, i32
  }
  func.func @transform_2(%arg0: i32) -> (i32, i32) {
    %c0_i32 = arith.constant 0 : i32
    %c0_i32_0 = arith.constant 0 : i32
    %c0_i32_1 = arith.constant 0 : i32
    return %c0_i32, %c0_i32_0 : i32, i32
  }
  func.func @transform_3(%arg0: i32) -> (i32, i32) {
    %c0_i32 = arith.constant 0 : i32
    %c0_i32_0 = arith.constant 0 : i32
    %c0_i32_1 = arith.constant 0 : i32
    return %c0_i32, %c0_i32_0 : i32, i32
  }
  func.func @transform_4(%arg0: i32) -> (i32, i32) {
    %c0_i32 = arith.constant 0 : i32
    %c0_i32_0 = arith.constant 0 : i32
    %c0_i32_1 = arith.constant 0 : i32
    return %c0_i32, %c0_i32_0 : i32, i32
  }
  func.func @transform_5(%arg0: i32) -> (i32, i32) {
    %c0_i32 = arith.constant 0 : i32
    %c0_i32_0 = arith.constant 0 : i32
    return %c0_i32, %arg0 : i32, i32
  }
}

</mosaic_0001>

<llo_original>
// kernel: simple_net_forward.1
$region0: #{simple_net_forward.1}
  #allocation0 [shape = 'u32[]', space=smem, size = 0x4, offset = 0x4, fixed_abs, tag = 'smem constant byte address 0x4 - core index']
  #allocation1 [shape = 'u32[72,128]{1,0:T(1,128)}', space=vmem, size = 0x9000, scoped, tag = 'internal scratch']
  #allocation2 [shape = 'f32[1,1]{1,0:T(1,128)S(6)}', space=smem, size = 0x200, scoped, tag = 'scoped memory for simple_net_forward.1']
  %s0 = inlined_call_operand.vmem [shape: f32[128,10], index: 0, kind: input, shape index: {}]
  %s1 = inlined_call_operand.vmem [shape: f32[50,10], index: 1, kind: input, shape index: {}]
  %s2 = inlined_call_operand.vmem [shape: f32[50,1], index: 2, kind: input, shape index: {}]
  %s3 = inlined_call_operand.vmem [shape: f32[1,50], index: 3, kind: input, shape index: {}]
  %s4 = inlined_call_operand.<no memory space> [shape: f32[1,1], index: 4, kind: input, shape index: {}]
  %s5 = inlined_call_operand.vmem [shape: f32[1,128], index: 5, kind: output, shape index: {}]
  %s6 = sld [smem:[#allocation0]]
  $region30: #{simple_net_forward.1} parent=0
    _
  %s8 = ssub.s32 1, %s6
  %s9 = scalar_select 0, %s8, %s6
  %10 = sst [smem:[#allocation2]] %s4
  // Predicated region
  $region2: #{simple_net_forward.1} parent=0 // pred_check
    _
  $region3: #{simple_net_forward.1} parent=0 // pred_check_branch
    %12 = sbr.rel (0) target = $region5
  $region4: #{simple_net_forward.1} parent=0 // pred_region
    _
  $region5: #{simple_net_forward.1} parent=0 // pred_fallthru
    _
  // Predicated region
  $region6: #{simple_net_forward.1} parent=0 // pred_check
    _
  $region7: #{simple_net_forward.1} parent=0 // pred_check_branch
    %14 = sbr.rel (0) target = $region9
  $region8: #{simple_net_forward.1} parent=0 // pred_region
    _
  $region9: #{simple_net_forward.1} parent=0 // pred_fallthru
    _
  // Predicated region
  $region10: #{simple_net_forward.1} parent=0 // pred_check
    _
  $region11: #{simple_net_forward.1} parent=0 // pred_check_branch
    %16 = sbr.rel (0) target = $region13
  $region12: #{simple_net_forward.1} parent=0 // pred_region
    _
  $region13: #{simple_net_forward.1} parent=0 // pred_fallthru
    _
  // Predicated region
  $region14: #{simple_net_forward.1} parent=0 // pred_check
    _
  $region15: #{simple_net_forward.1} parent=0 // pred_check_branch
    %18 = sbr.rel (0) target = $region17
  $region16: #{simple_net_forward.1} parent=0 // pred_region
    _
  $region17: #{simple_net_forward.1} parent=0 // pred_fallthru
    _
  // Predicated region
  $region18: #{simple_net_forward.1} parent=0 // pred_check
    _
  $region19: #{simple_net_forward.1} parent=0 // pred_check_branch
    %20 = sbr.rel (0) target = $region21
  $region20: #{simple_net_forward.1} parent=0 // pred_region
    _
  $region21: #{simple_net_forward.1} parent=0 // pred_fallthru
    _
  %v21 = vld [vmem:[%s1] sm:$0xff]
  %v22 = vld [vmem:[%s1 + $0x8] sm:$0xff]
  %v23 = vld [vmem:[%s1 + $0x10] sm:$0xff]
  %v24 = vld [vmem:[%s1 + $0x18] sm:$0xff]
  %v25 = vld [vmem:[%s1 + $0x20] sm:$0xff]
  %v26 = vld [vmem:[%s1 + $0x28] sm:$0xff]
  %v27 = vld [vmem:[%s1 + $0x30] sm:$0x3]
  %v28 = vld [vmem:[%s2] sm:$0xff]
  %v29 = vld [vmem:[%s2 + $0x8] sm:$0xff]
  %v30 = vld [vmem:[%s2 + $0x10] sm:$0xff]
  %v31 = vld [vmem:[%s2 + $0x18] sm:$0xff]
  %v32 = vld [vmem:[%s2 + $0x20] sm:$0xff]
  %v33 = vld [vmem:[%s2 + $0x28] sm:$0xff]
  %v34 = vld [vmem:[%s2 + $0x30] sm:$0x3]
  %v35 = vld [vmem:[%s3] sm:$0x1]
  %s36 = sld [smem:[#allocation2]]
  %v37 = vld [vmem:[%s0] sm:$0xff]
  %v38 = vld [vmem:[%s0 + $0x8] sm:$0xff]
  %v39 = vld [vmem:[%s0 + $0x10] sm:$0xff]
  %v40 = vld [vmem:[%s0 + $0x18] sm:$0xff]
  %v41 = vld [vmem:[%s0 + $0x20] sm:$0xff]
  %v42 = vld [vmem:[%s0 + $0x28] sm:$0xff]
  %v43 = vld [vmem:[%s0 + $0x30] sm:$0xff]
  %v44 = vld [vmem:[%s0 + $0x38] sm:$0xff]
  %v45 = vld [vmem:[%s0 + $0x40] sm:$0xff]
  %v46 = vld [vmem:[%s0 + $0x48] sm:$0xff]
  %v47 = vld [vmem:[%s0 + $0x50] sm:$0xff]
  %v48 = vld [vmem:[%s0 + $0x58] sm:$0xff]
  %v49 = vld [vmem:[%s0 + $0x60] sm:$0xff]
  %v50 = vld [vmem:[%s0 + $0x68] sm:$0xff]
  %v51 = vld [vmem:[%s0 + $0x70] sm:$0xff]
  %v52 = vld [vmem:[%s0 + $0x78] sm:$0xff]
  %54 = vset.pattern.permute.xlu0 0
  %55 = vperm.xlu0 %54, %v28
  %v56 = vpop.permute.xlu0 %55
  %59 = vset.pattern.permute.xlu0 0
  %60 = vperm.xlu0 %59, %v29
  %v61 = vpop.permute.xlu0 %60
  %64 = vset.pattern.permute.xlu0 0
  %65 = vperm.xlu0 %64, %v30
  %v66 = vpop.permute.xlu0 %65
  %69 = vset.pattern.permute.xlu0 0
  %70 = vperm.xlu0 %69, %v31
  %v71 = vpop.permute.xlu0 %70
  %74 = vset.pattern.permute.xlu0 0
  %75 = vperm.xlu0 %74, %v32
  %v76 = vpop.permute.xlu0 %75
  %79 = vset.pattern.permute.xlu0 0
  %80 = vperm.xlu0 %79, %v33
  %v81 = vpop.permute.xlu0 %80
  %84 = vset.pattern.permute.xlu0 0
  %85 = vperm.xlu0 %84, %v34
  %v86 = vpop.permute.xlu0 %85
  %vm88 = vcmask 80896
  %v90 = vsel %vm88, %v21, 0
  %v93 = vsel %vm88, %v22, 0
  %v96 = vsel %vm88, %v23, 0
  %v99 = vsel %vm88, %v24, 0
  %v102 = vsel %vm88, %v25, 0
  %v105 = vsel %vm88, %v26, 0
  %v108 = vsel %vm88, %v27, 0
  %v111 = vsel %vm88, %v37, 0
  %v114 = vsel %vm88, %v38, 0
  %v117 = vsel %vm88, %v39, 0
  %v120 = vsel %vm88, %v40, 0
  %v123 = vsel %vm88, %v41, 0
  %v126 = vsel %vm88, %v42, 0
  %v129 = vsel %vm88, %v43, 0
  %v132 = vsel %vm88, %v44, 0
  %v135 = vsel %vm88, %v45, 0
  %v138 = vsel %vm88, %v46, 0
  %v141 = vsel %vm88, %v47, 0
  %v144 = vsel %vm88, %v48, 0
  %v147 = vsel %vm88, %v49, 0
  %v150 = vsel %vm88, %v50, 0
  %v153 = vsel %vm88, %v51, 0
  %v156 = vsel %vm88, %v52, 0
  %158 = vmatpush.xpose.msra.mxu0 %v156
  %159 = vmatpush.xpose.msra.mxu0 %v153
  %160 = vmatpush.xpose.msra.mxu0 %v150
  %161 = vmatpush.xpose.msra.mxu0 %v147
  %162 = vmatpush.xpose.msra.mxu0 %v144
  %163 = vmatpush.xpose.msra.mxu0 %v141
  %164 = vmatpush.xpose.msra.mxu0 %v138
  %165 = vmatpush.xpose.msra.mxu0 %v135
  %166 = vmatpush.xpose.msra.mxu0 %v132
  %167 = vmatpush.xpose.msra.mxu0 %v129
  %168 = vmatpush.xpose.msra.mxu0 %v126
  %169 = vmatpush.xpose.msra.mxu0 %v123
  %170 = vmatpush.xpose.msra.mxu0 %v120
  %171 = vmatpush.xpose.msra.mxu0 %v117
  %172 = vmatpush.xpose.msra.mxu0 %v114
  %173 = vmatpush.xpose.msra.mxu0 %v111
  %174 = vmatmul.f32.gmra.mxu0 %v90
  %v175 = vpop.f32.mrf.mxu0
  %v176 = vadd.f32 %v56, %v175
  %177 = vmatmul.f32.gmra.mxu0 %v93
  %v178 = vpop.f32.mrf.mxu0
  %v179 = vadd.f32 %v61, %v178
  %180 = vmatmul.f32.gmra.mxu0 %v96
  %v181 = vpop.f32.mrf.mxu0
  %v182 = vadd.f32 %v66, %v181
  %183 = vmatmul.f32.gmra.mxu0 %v99
  %v184 = vpop.f32.mrf.mxu0
  %v185 = vadd.f32 %v71, %v184
  %186 = vmatmul.f32.gmra.mxu0 %v102
  %v187 = vpop.f32.mrf.mxu0
  %v188 = vadd.f32 %v76, %v187
  %189 = vmatmul.f32.gmra.mxu0 %v105
  %v190 = vpop.f32.mrf.mxu0
  %v191 = vadd.f32 %v81, %v190
  %192 = vmatmul.f32.gmra.mxu0 %v108
  %v193 = vpop.f32.mrf.mxu0
  %v194 = vadd.f32 %v86, %v193
  %195 = vdwg.mxu0
  %v196 = vmax.f32 %v176, 0.0
  %v197 = vmax.f32 %v179, 0.0
  %v198 = vmax.f32 %v182, 0.0
  %v199 = vmax.f32 %v185, 0.0
  %v200 = vmax.f32 %v188, 0.0
  %v201 = vmax.f32 %v191, 0.0
  %v202 = vmax.f32 %v194, 0.0
  %v203 = vstv %s36
  %vm204 = vcmask 408576
  %v206 = vsel %vm204, %v35, 0
  %vm208 = vcmask 1041408
  %v210 = vsel %vm208, %v202, 0
  %212 = vmatpush.msra.mxu0 0.0
  %213 = vmatpush.msra.mxu0 0.0
  %214 = vmatpush.msra.mxu0 0.0
  %215 = vmatpush.msra.mxu0 0.0
  %216 = vmatpush.msra.mxu0 0.0
  %217 = vmatpush.msra.mxu0 0.0
  %218 = vmatpush.msra.mxu0 0.0
  %219 = vmatpush.msra.mxu0 0.0
  %220 = vmatpush.msra.mxu0 0.0
  %221 = vmatpush.msra.mxu0 %v210
  %222 = vmatpush.msra.mxu0 %v201
  %223 = vmatpush.msra.mxu0 %v200
  %224 = vmatpush.msra.mxu0 %v199
  %225 = vmatpush.msra.mxu0 %v198
  %226 = vmatpush.msra.mxu0 %v197
  %227 = vmatpush.msra.mxu0 %v196
  %228 = vmatmul.f32.gmra.mxu0 %v206
  %v229 = vpop.f32.mrf.mxu0
  %v230 = vadd.f32 %v203, %v229
  %231 = vdwg.mxu0
  %232 = vst [vmem:[%s5] sm:$0x1] %v230
  // Predicated region
  $region22: #{simple_net_forward.1} parent=0 // pred_check
    _
  $region23: #{simple_net_forward.1} parent=0 // pred_check_branch
    %234 = sbr.rel (0) target = $region25
  $region24: #{simple_net_forward.1} parent=0 // pred_region
    _
  $region25: #{simple_net_forward.1} parent=0 // pred_fallthru
    _
  // Predicated region
  $region26: #{simple_net_forward.1} parent=0 // pred_check
    _
  $region27: #{simple_net_forward.1} parent=0 // pred_check_branch
    %236 = sbr.rel (0) target = $region29
  $region28: #{simple_net_forward.1} parent=0 // pred_region
    _
  $region29: #{simple_net_forward.1} parent=0 // pred_fallthru
    _

</llo_original>
